<compile_context>
chip_gen: v7x
topology: tpu7x:2x2x1
jax: 0.10.0
libtpu: 0.0.40
codegen_flags: <defaults>
</compile_context>

<pallas_src>
import functools

import numpy as np

import jax
import jax.numpy as jnp
from jax.experimental import pallas as pl
from jax.experimental.pallas import tpu as pltpu

_MIB = 1024 * 1024


# --------------------------------------------------------------------------- #
# VMEM budgeting / tile selection / layout plumbing
# --------------------------------------------------------------------------- #
def _vmem_budget_bytes():
    """Returns (vmem_limit_bytes to request or None, bytes usable for sizing)."""
    try:
        cap = int(pltpu.get_tpu_info().vmem_capacity_bytes)
    except Exception:
        # Unknown generation: stay under every default scoped limit and do not
        # override the compiler's own limit.
        return None, 12 * _MIB
    limit = min(cap // 2, 96 * _MIB)     # leave headroom for compiler scratch
    return limit, limit


def _compiler_params(vmem_limit):
    kwargs = dict(dimension_semantics=("parallel", "parallel"))
    if vmem_limit is not None:
        kwargs["vmem_limit_bytes"] = int(vmem_limit)
    return pltpu.CompilerParams(**kwargs)


def _choose_tile(n_axis, plane_elems, itemsize, budget_bytes, *, multiple=1,
                 override=None):
    """Tile length along the leading spatial axis.

    Peak working set per tile element ~= 2*itemsize (double-buffered input)
    + 4 (f32 cast) + ~12 bytes (live f32 first/second differences).
    """
    if override is not None:
        t = int(override)
    else:
        per_elem = 2 * itemsize + 16
        t = int(budget_bytes // max(per_elem * plane_elems, 1))
    if multiple > 1:
        t = (t // multiple) * multiple
    t = max(t, multiple if multiple > 1 else 3)
    return min(t, n_axis)


def _move_largest_axis_last(pred, voxel_dims):
    """Lane-density: permute spatial axes so the largest one is minor (lane).

    The bending loss is invariant under a consistent permutation of the
    spatial axes and the matching voxel_dims columns.
    """
    n_sp = pred.ndim - 2
    spatial = list(pred.shape[2:])
    amax = int(np.argmax(spatial))
    if spatial[amax] <= spatial[-1]:
        return pred, voxel_dims
    order = [i for i in range(n_sp) if i != amax] + [amax]
    pred = jnp.transpose(pred, (0, 1) + tuple(i + 2 for i in order))
    voxel_dims = jnp.take(voxel_dims, jnp.asarray(order, dtype=jnp.int32), axis=1)
    return pred, voxel_dims


# --------------------------------------------------------------------------- #
# In-kernel helpers
# --------------------------------------------------------------------------- #
def _ssq_split(arr, n_valid_last, is_last):
    """Sum of squares of `arr`, dropping entries past `n_valid_last` along
    axis 1 when this is the (possibly ragged) last tile.

    All sizes are trace-time constants, so no masks over non-minor dims and no
    zero-sized ops are emitted; padded-plane garbage never reaches the result.
    """
    n_full = arr.shape[1]

    def sq(a):
        return jnp.sum(a * a)

    if n_valid_last >= n_full:
        return sq(arr)
    if n_valid_last <= 0:
        return jnp.where(is_last, 0.0, sq(arr))
    head = arr[:, :n_valid_last]
    tail = arr[:, n_valid_last:]
    return sq(head) + jnp.where(is_last, 0.0, sq(tail))


def _write_slab(out_ref, sums):
    lane = jax.lax.broadcasted_iota(jnp.int32, (8, 128), 1)
    slab = jnp.zeros((8, 128), jnp.float32)
    for k, s in enumerate(sums):
        slab = jnp.where(lane == k, s, slab)
    out_ref[...] = slab


# --------------------------------------------------------------------------- #
# Kernels
# --------------------------------------------------------------------------- #
def _bending3d_kernel(pred_ref, out_ref, *, n_tiles, rem):
    """pred_ref: (C, Td, H, W) tile of one batch;  out_ref: (8,128) slab."""
    p = pred_ref[...].astype(jnp.float32)
    is_last = pl.program_id(1) == n_tiles - 1

    # Per-plane (H/W) second differences: valid for every real plane (g < D).
    gy = p[:, :, 1:, :] - p[:, :, :-1, :]
    hyy = gy[:, :, 1:, :] - gy[:, :, :-1, :]
    s_yy = _ssq_split(hyy, rem, is_last)
    hyz = gy[:, :, :, 1:] - gy[:, :, :, :-1]
    s_yz = _ssq_split(hyz, rem, is_last)
    gz = p[:, :, :, 1:] - p[:, :, :, :-1]
    hzz = gz[:, :, :, 1:] - gz[:, :, :, :-1]
    s_zz = _ssq_split(hzz, rem, is_last)

    # D-direction first difference: within-tile plane pairs only; the pairs
    # straddling a tile boundary are re-added by the JAX epilogue.
    gx = p[:, 1:, :, :] - p[:, :-1, :, :]
    hxy = gx[:, :, 1:, :] - gx[:, :, :-1, :]
    s_xy = _ssq_split(hxy, rem - 1, is_last)
    hxz = gx[:, :, :, 1:] - gx[:, :, :, :-1]
    s_xz = _ssq_split(hxz, rem - 1, is_last)
    hxx = gx[:, 1:, :, :] - gx[:, :-1, :, :]
    s_xx = _ssq_split(hxx, rem - 2, is_last)

    _write_slab(out_ref, (s_xx, s_xy, s_xz, s_yy, s_yz, s_zz))


def _bending2d_kernel(pred_ref, out_ref, *, n_tiles, rem):
    """pred_ref: (C, Th, W) tile of one batch;  out_ref: (8,128) slab."""
    p = pred_ref[...].astype(jnp.float32)
    is_last = pl.program_id(1) == n_tiles - 1

    gy = p[:, :, 1:] - p[:, :, :-1]
    hyy = gy[:, :, 1:] - gy[:, :, :-1]
    s_yy = _ssq_split(hyy, rem, is_last)

    gx = p[:, 1:, :] - p[:, :-1, :]
    hxy = gx[:, :, 1:] - gx[:, :, :-1]
    s_xy = _ssq_split(hxy, rem - 1, is_last)
    hxx = gx[:, 1:, :] - gx[:, :-1, :]
    s_xx = _ssq_split(hxx, rem - 2, is_last)

    _write_slab(out_ref, (s_xx, s_yy, s_xy))


# --------------------------------------------------------------------------- #
# Wrappers (tiling, epilogue boundary fixup, scaling, normalization)
# --------------------------------------------------------------------------- #
def bending_loss_3d(pred, voxel_dims, *, tile=None):
    pred, voxel_dims = _move_largest_axis_last(pred, voxel_dims)
    B, C, D, H, W = pred.shape
    if min(D, H, W) < 3:
        raise ValueError("Bending loss needs every spatial dim >= 3.")

    vmem_limit, sizing = _vmem_budget_bytes()
    itemsize = pred.dtype.itemsize
    td = _choose_tile(D, C * H * W, itemsize, sizing, override=tile)
    n_tiles = -(-D // td)
    rem = D - (n_tiles - 1) * td

    kernel = functools.partial(_bending3d_kernel, n_tiles=n_tiles, rem=rem)
    parts = pl.pallas_call(
        kernel,
        out_shape=jax.ShapeDtypeStruct((B, n_tiles, 8, 128), jnp.float32),
        grid_spec=pltpu.PrefetchScalarGridSpec(
            num_scalar_prefetch=0,
            grid=(B, n_tiles),
            in_specs=[pl.BlockSpec((None, C, td, H, W),
                                   lambda b, t: (b, 0, t, 0, 0))],
            out_specs=pl.BlockSpec((None, None, 8, 128),
                                   lambda b, t: (b, t, 0, 0)),
        ),
        compiler_params=_compiler_params(vmem_limit),
    )(pred)

    s_xx = jnp.sum(parts[:, :, 0, 0], axis=1)
    s_xy = jnp.sum(parts[:, :, 0, 1], axis=1)
    s_xz = jnp.sum(parts[:, :, 0, 2], axis=1)
    s_yy = jnp.sum(parts[:, :, 0, 3], axis=1)
    s_yz = jnp.sum(parts[:, :, 0, 4], axis=1)
    s_zz = jnp.sum(parts[:, :, 0, 5], axis=1)

    if n_tiles > 1:
        # Terms whose D-stencil straddles a tile boundary: 4 planes / boundary.
        bnd = np.arange(1, n_tiles) * td                            # plane b
        idx = np.minimum(bnd[:, None] + np.arange(-2, 2)[None, :], D - 1)
        q = pred[:, :, idx, :, :].astype(jnp.float32)               # (B,C,nB,4,H,W)
        d1 = q[:, :, :, 1:] - q[:, :, :, :-1]                       # gx at b-2,b-1,b
        hxx_b = d1[:, :, :, 1:] - d1[:, :, :, :-1]                  # centers b-2,b-1
        w = np.ones((bnd.size, 2), np.float32)
        w[:, 1] = (bnd + 1 <= D - 1).astype(np.float32)             # b-1 needs plane b+1
        s_xx = s_xx + jnp.einsum("bcnkhw,nk->b", hxx_b * hxx_b, jnp.asarray(w))
        gx_b = q[:, :, :, 2] - q[:, :, :, 1]                        # gx at center b-1
        hxy_b = gx_b[:, :, :, 1:, :] - gx_b[:, :, :, :-1, :]
        hxz_b = gx_b[:, :, :, :, 1:] - gx_b[:, :, :, :, :-1]
        s_xy = s_xy + jnp.sum(hxy_b * hxy_b, axis=(1, 2, 3, 4))
        s_xz = s_xz + jnp.sum(hxz_b * hxz_b, axis=(1, 2, 3, 4))

    dx = voxel_dims[:, 0].astype(jnp.float32)
    dy = voxel_dims[:, 1].astype(jnp.float32)
    dz = voxel_dims[:, 2].astype(jnp.float32)
    dx2, dy2, dz2 = dx * dx, dy * dy, dz * dz

    loss = (jnp.sum(s_xx / (dx2 * dx2)) / float(B * C * (D - 2) * H * W)
            + 2.0 * jnp.sum(s_xy / (dx2 * dy2)) / float(B * C * (D - 1) * (H - 1) * W)
            + 2.0 * jnp.sum(s_xz / (dx2 * dz2)) / float(B * C * (D - 1) * H * (W - 1))
            + jnp.sum(s_yy / (dy2 * dy2)) / float(B * C * D * (H - 2) * W)
            + 2.0 * jnp.sum(s_yz / (dy2 * dz2)) / float(B * C * D * (H - 1) * (W - 1))
            + jnp.sum(s_zz / (dz2 * dz2)) / float(B * C * D * H * (W - 2)))
    return loss


def bending_loss_2d(pred, voxel_dims, *, tile=None):
    pred, voxel_dims = _move_largest_axis_last(pred, voxel_dims)
    B, C, H, W = pred.shape
    if min(H, W) < 3:
        raise ValueError("Bending loss needs every spatial dim >= 3.")

    vmem_limit, sizing = _vmem_budget_bytes()
    itemsize = pred.dtype.itemsize
    # The tiled axis is the sublane axis here, so the tile must be a multiple
    # of 8 (or the full extent).
    th = _choose_tile(H, C * W, itemsize, sizing, multiple=8, override=tile)
    n_tiles = -(-H // th)
    rem = H - (n_tiles - 1) * th

    kernel = functools.partial(_bending2d_kernel, n_tiles=n_tiles, rem=rem)
    parts = pl.pallas_call(
        kernel,
        out_shape=jax.ShapeDtypeStruct((B, n_tiles, 8, 128), jnp.float32),
        grid_spec=pltpu.PrefetchScalarGridSpec(
            num_scalar_prefetch=0,
            grid=(B, n_tiles),
            in_specs=[pl.BlockSpec((None, C, th, W),
                                   lambda b, t: (b, 0, t, 0))],
            out_specs=pl.BlockSpec((None, None, 8, 128),
                                   lambda b, t: (b, t, 0, 0)),
        ),
        compiler_params=_compiler_params(vmem_limit),
    )(pred)

    s_xx = jnp.sum(parts[:, :, 0, 0], axis=1)
    s_yy = jnp.sum(parts[:, :, 0, 1], axis=1)
    s_xy = jnp.sum(parts[:, :, 0, 2], axis=1)

    if n_tiles > 1:
        bnd = np.arange(1, n_tiles) * th
        idx = np.minimum(bnd[:, None] + np.arange(-2, 2)[None, :], H - 1)
        q = pred[:, :, idx, :].astype(jnp.float32)                  # (B,C,nB,4,W)
        d1 = q[:, :, :, 1:] - q[:, :, :, :-1]
        hxx_b = d1[:, :, :, 1:] - d1[:, :, :, :-1]                  # centers b-2,b-1
        w = np.ones((bnd.size, 2), np.float32)
        w[:, 1] = (bnd + 1 <= H - 1).astype(np.float32)
        s_xx = s_xx + jnp.einsum("bcnkw,nk->b", hxx_b * hxx_b, jnp.asarray(w))
        gx_b = q[:, :, :, 2] - q[:, :, :, 1]                        # (B,C,nB,W)
        hxy_b = gx_b[:, :, :, 1:] - gx_b[:, :, :, :-1]
        s_xy = s_xy + jnp.sum(hxy_b * hxy_b, axis=(1, 2, 3))

    dx = voxel_dims[:, 0].astype(jnp.float32)
    dy = voxel_dims[:, 1].astype(jnp.float32)
    dx2, dy2 = dx * dx, dy * dy

    loss = (jnp.sum(s_xx / (dx2 * dx2)) / float(B * C * (H - 2) * W)
            + jnp.sum(s_yy / (dy2 * dy2)) / float(B * C * H * (W - 2))
            + 2.0 * jnp.sum(s_xy / (dx2 * dy2)) / float(B * C * (H - 1) * (W - 1)))
    return loss


# --------------------------------------------------------------------------- #
# Module wrapper
# --------------------------------------------------------------------------- #
def bending_forward(pred, voxel_dims):
    """Equivalent of Bending.forward(pred, voxel_dims)."""
    dim = pred.ndim - 2
    if dim == 2:
        return bending_loss_2d(pred, voxel_dims[:, :2])
    elif dim == 3:
        return bending_loss_3d(pred, voxel_dims[:, :3])
    else:
        raise ValueError("Invalid input shape. Only 2D and 3D tensors are supported.")


# --------------------------------------------------------------------------- #
# Pure JAX reference (mirrors the PyTorch module)
# --------------------------------------------------------------------------- #
def _ref_2d(pred, voxel_dims):
    dx = voxel_dims[:, 0].reshape(-1, 1, 1, 1)
    dy = voxel_dims[:, 1].reshape(-1, 1, 1, 1)
    px = (pred[:, :, 1:, :] - pred[:, :, :-1, :]) / dx
    py = (pred[:, :, :, 1:] - pred[:, :, :, :-1]) / dy
    pxx = (px[:, :, 1:, :] - px[:, :, :-1, :]) / dx
    pyy = (py[:, :, :, 1:] - py[:, :, :, :-1]) / dy
    pxy = (px[:, :, :, 1:] - px[:, :, :, :-1]) / dy
    return jnp.mean(pxx ** 2) + jnp.mean(pyy ** 2) + jnp.mean(2 * pxy ** 2)


def _ref_3d(pred, voxel_dims):
    dx = voxel_dims[:, 0].reshape(-1, 1, 1, 1, 1)
    dy = voxel_dims[:, 1].reshape(-1, 1, 1, 1, 1)
    dz = voxel_dims[:, 2].reshape(-1, 1, 1, 1, 1)
    px = (pred[:, :, 1:, :, :] - pred[:, :, :-1, :, :]) / dx
    py = (pred[:, :, :, 1:, :] - pred[:, :, :, :-1, :]) / dy
    pz = (pred[:, :, :, :, 1:] - pred[:, :, :, :, :-1]) / dz
    pxx = (px[:, :, 1:, :, :] - px[:, :, :-1, :, :]) / dx
    pxy = (px[:, :, :, 1:, :] - px[:, :, :, :-1, :]) / dy
    pxz = (px[:, :, :, :, 1:] - px[:, :, :, :, :-1]) / dz
    pyy = (py[:, :, :, 1:, :] - py[:, :, :, :-1, :]) / dy
    pyz = (py[:, :, :, :, 1:] - py[:, :, :, :, :-1]) / dz
    pzz = (pz[:, :, :, :, 1:] - pz[:, :, :, :, :-1]) / dz
    return (jnp.mean(pxx ** 2) + jnp.mean(2 * pxy ** 2) + jnp.mean(2 * pxz ** 2)
            + jnp.mean(pyy ** 2) + jnp.mean(2 * pyz ** 2) + jnp.mean(pzz ** 2))


if __name__ == "__main__":
    key = jax.random.PRNGKey(0)
    k1, k2, k3, k4, k5 = jax.random.split(key, 5)

    voxel_dims = jax.random.uniform(k2, (2, 3), dtype=jnp.float32,
                                    minval=0.5, maxval=2.0)

    # --- 2D: pred [B=2, C=4, H=16, W=16] ---------------------------------- #
    pred2d = jax.random.normal(k1, (2, 4, 16, 16), dtype=jnp.float32)
    ref2d = _ref_2d(pred2d, voxel_dims[:, :2])
    out2d = jax.block_until_ready(bending_forward(pred2d, voxel_dims))
    assert jnp.allclose(out2d, ref2d, rtol=1e-5, atol=1e-5), (out2d, ref2d)
    # Forced multi-tile path: grid=(B,2), boundary fixup in the epilogue.
    out2d_t = jax.block_until_ready(
        bending_loss_2d(pred2d, voxel_dims[:, :2], tile=8))
    assert jnp.allclose(out2d_t, ref2d, rtol=1e-5, atol=1e-5), (out2d_t, ref2d)

    # 2D with the largest spatial dim leading -> lane-density permutation.
    pred2dt = jax.random.normal(k3, (2, 2, 24, 16), dtype=jnp.float32)
    ref2dt = _ref_2d(pred2dt, voxel_dims[:, :2])
    out2dt = jax.block_until_ready(
        bending_loss_2d(pred2dt, voxel_dims[:, :2], tile=8))
    assert jnp.allclose(out2dt, ref2dt, rtol=1e-5, atol=1e-5), (out2dt, ref2dt)

    # --- 3D: pred [B=2, C=3, D=8, H=8, W=16] ------------------------------- #
    pred3d = jax.random.normal(k4, (2, 3, 8, 8, 16), dtype=jnp.float32)
    ref3d = _ref_3d(pred3d, voxel_dims)
    out3d = jax.block_until_ready(bending_forward(pred3d, voxel_dims))
    assert jnp.allclose(out3d, ref3d, rtol=1e-5, atol=1e-5), (out3d, ref3d)
    # Forced ragged multi-tile path: tiles of 3 planes -> grid=(B,3), rem=2.
    out3d_t = jax.block_until_ready(bending_loss_3d(pred3d, voxel_dims, tile=3))
    assert jnp.allclose(out3d_t, ref3d, rtol=1e-5, atol=1e-5), (out3d_t, ref3d)

    # 3D with the largest spatial dim leading -> permuted + ragged tiling.
    pred3dt = jax.random.normal(k5, (2, 3, 16, 8, 8), dtype=jnp.float32)
    ref3dt = _ref_3d(pred3dt, voxel_dims)
    out3dt = jax.block_until_ready(bending_loss_3d(pred3dt, voxel_dims, tile=3))
    assert jnp.allclose(out3dt, ref3dt, rtol=1e-5, atol=1e-5), (out3dt, ref3dt)

    print("KERNEL_OK")
</pallas_src>

<mosaic_0001>
module attributes {stable_mosaic.version = 11 : i64} {
  func.func @_bending2d_kernel(%arg0: i32, %arg1: i32, %arg2: memref<1x4x16x16xf32, #tpu.memory_space<vmem>>, %arg3: memref<1x1x8x128xf32, #tpu.memory_space<vmem>>) attributes {dimension_semantics = [#tpu.dimension_semantics<parallel>, #tpu.dimension_semantics<parallel>], iteration_bounds = array<i64: 2, 1>, scalar_prefetch = 0 : i64, scratch_operands = 0 : i64, tpu.core_type = #tpu.core_type<tc>, window_params = [{transform_indices = @transform_0, window_bounds = array<i64: 1, 4, 16, 16>}, {transform_indices = @transform_1, window_bounds = array<i64: 1, 1, 8, 128>}]} {
    %c0 = arith.constant 0 : index
    %c0_0 = arith.constant 0 : index
    %c0_1 = arith.constant 0 : index
    %c0_2 = arith.constant 0 : index
    %0 = vector.load %arg2[%c0, %c0_0, %c0_1, %c0_2] : memref<1x4x16x16xf32, #tpu.memory_space<vmem>>, vector<1x4x16x16xf32>
    %1 = vector.shape_cast %0 : vector<1x4x16x16xf32> to vector<4x16x16xf32>
    %2 = vector.extract_strided_slice %1 {offsets = [0, 0, 1], sizes = [4, 16, 15], strides = [1, 1, 1]} : vector<4x16x16xf32> to vector<4x16x15xf32>
    %3 = vector.extract_strided_slice %1 {offsets = [0, 0, 0], sizes = [4, 16, 15], strides = [1, 1, 1]} : vector<4x16x16xf32> to vector<4x16x15xf32>
    %4 = arith.subf %2, %3 : vector<4x16x15xf32>
    %5 = vector.extract_strided_slice %4 {offsets = [0, 0, 1], sizes = [4, 16, 14], strides = [1, 1, 1]} : vector<4x16x15xf32> to vector<4x16x14xf32>
    %6 = vector.extract_strided_slice %4 {offsets = [0, 0, 0], sizes = [4, 16, 14], strides = [1, 1, 1]} : vector<4x16x15xf32> to vector<4x16x14xf32>
    %7 = arith.subf %5, %6 : vector<4x16x14xf32>
    %8 = arith.mulf %7, %7 : vector<4x16x14xf32>
    %9 = vector.shape_cast %8 : vector<4x16x14xf32> to vector<1x4x16x14xf32>
    %cst = arith.constant dense<0.000000e+00> : vector<1xf32>
    %10 = vector.multi_reduction <add>, %9, %cst [1, 2, 3] : vector<1x4x16x14xf32> to vector<1xf32>
    %11 = vector.shape_cast %10 : vector<1xf32> to vector<1x1x1x1xf32>
    %12 = vector.extract %11[0, 0, 0, 0] : f32 from vector<1x1x1x1xf32>
    %13 = vector.extract_strided_slice %1 {offsets = [0, 1, 0], sizes = [4, 15, 16], strides = [1, 1, 1]} : vector<4x16x16xf32> to vector<4x15x16xf32>
    %14 = vector.extract_strided_slice %1 {offsets = [0, 0, 0], sizes = [4, 15, 16], strides = [1, 1, 1]} : vector<4x16x16xf32> to vector<4x15x16xf32>
    %15 = arith.subf %13, %14 : vector<4x15x16xf32>
    %16 = vector.extract_strided_slice %15 {offsets = [0, 0, 1], sizes = [4, 15, 15], strides = [1, 1, 1]} : vector<4x15x16xf32> to vector<4x15x15xf32>
    %17 = vector.extract_strided_slice %15 {offsets = [0, 0, 0], sizes = [4, 15, 15], strides = [1, 1, 1]} : vector<4x15x16xf32> to vector<4x15x15xf32>
    %18 = arith.subf %16, %17 : vector<4x15x15xf32>
    %19 = arith.mulf %18, %18 : vector<4x15x15xf32>
    %20 = vector.shape_cast %19 : vector<4x15x15xf32> to vector<1x4x15x15xf32>
    %cst_3 = arith.constant dense<0.000000e+00> : vector<1xf32>
    %21 = vector.multi_reduction <add>, %20, %cst_3 [1, 2, 3] : vector<1x4x15x15xf32> to vector<1xf32>
    %22 = vector.shape_cast %21 : vector<1xf32> to vector<1x1x1x1xf32>
    %23 = vector.extract %22[0, 0, 0, 0] : f32 from vector<1x1x1x1xf32>
    %24 = vector.extract_strided_slice %15 {offsets = [0, 1, 0], sizes = [4, 14, 16], strides = [1, 1, 1]} : vector<4x15x16xf32> to vector<4x14x16xf32>
    %25 = vector.extract_strided_slice %15 {offsets = [0, 0, 0], sizes = [4, 14, 16], strides = [1, 1, 1]} : vector<4x15x16xf32> to vector<4x14x16xf32>
    %26 = arith.subf %24, %25 : vector<4x14x16xf32>
    %27 = arith.mulf %26, %26 : vector<4x14x16xf32>
    %28 = vector.shape_cast %27 : vector<4x14x16xf32> to vector<1x4x14x16xf32>
    %cst_4 = arith.constant dense<0.000000e+00> : vector<1xf32>
    %29 = vector.multi_reduction <add>, %28, %cst_4 [1, 2, 3] : vector<1x4x14x16xf32> to vector<1xf32>
    %30 = vector.shape_cast %29 : vector<1xf32> to vector<1x1x1x1xf32>
    %31 = vector.extract %30[0, 0, 0, 0] : f32 from vector<1x1x1x1xf32>
    %32 = tpu.iota {dimensions = array<i32: 1>} : vector<8x128xi32>
    %cst_5 = arith.constant 0.000000e+00 : f32
    %33 = vector.broadcast %cst_5 : f32 to vector<8x128xf32>
    %c0_i32 = arith.constant 0 : i32
    %34 = vector.broadcast %c0_i32 : i32 to vector<8x128xi32>
    %35 = arith.cmpi eq, %32, %34 : vector<8x128xi32>
    %36 = vector.broadcast %31 : f32 to vector<8x128xf32>
    %37 = arith.select %35, %36, %33 : vector<8x128xi1>, vector<8x128xf32>
    %c1_i32 = arith.constant 1 : i32
    %38 = vector.broadcast %c1_i32 : i32 to vector<8x128xi32>
    %39 = arith.cmpi eq, %32, %38 : vector<8x128xi32>
    %40 = vector.broadcast %12 : f32 to vector<8x128xf32>
    %41 = arith.select %39, %40, %37 : vector<8x128xi1>, vector<8x128xf32>
    %c2_i32 = arith.constant 2 : i32
    %42 = vector.broadcast %c2_i32 : i32 to vector<8x128xi32>
    %43 = arith.cmpi eq, %32, %42 : vector<8x128xi32>
    %44 = vector.broadcast %23 : f32 to vector<8x128xf32>
    %45 = arith.select %43, %44, %41 : vector<8x128xi1>, vector<8x128xf32>
    %c0_6 = arith.constant 0 : index
    %c0_7 = arith.constant 0 : index
    %c0_8 = arith.constant 0 : index
    %c0_9 = arith.constant 0 : index
    %46 = vector.load %arg3[%c0_6, %c0_7, %c0_8, %c0_9] : memref<1x1x8x128xf32, #tpu.memory_space<vmem>>, vector<1x1x8x128xf32>
    %47 = vector.shape_cast %46 : vector<1x1x8x128xf32> to vector<8x128xf32>
    %48 = vector.shape_cast %45 : vector<8x128xf32> to vector<1x1x8x128xf32>
    tpu.vector_store %arg3[%c0_6, %c0_7, %c0_8, %c0_9], %48 {strides = array<i32>} : memref<1x1x8x128xf32, #tpu.memory_space<vmem>>, vector<1x1x8x128xf32>,
    return
  }
  func.func @transform_0(%arg0: i32, %arg1: i32) -> (i32, i32, i32, i32) {
    %c0_i32 = arith.constant 0 : i32
    %c0_i32_0 = arith.constant 0 : i32
    %c0_i32_1 = arith.constant 0 : i32
    return %arg0, %c0_i32, %arg1, %c0_i32_0 : i32, i32, i32, i32
  }
  func.func @transform_1(%arg0: i32, %arg1: i32) -> (i32, i32, i32, i32) {
    %c0_i32 = arith.constant 0 : i32
    %c0_i32_0 = arith.constant 0 : i32
    %c0_i32_1 = arith.constant 0 : i32
    return %arg0, %arg1, %c0_i32, %c0_i32_0 : i32, i32, i32, i32
  }
}

</mosaic_0001>

<llo_original>
// kernel: tpu_custom_call.1
$region0: #{tpu_custom_call.1}
  #allocation0 [shape = 'u32[]', space=smem, size = 0x4, offset = 0x4, fixed_abs, tag = 'smem constant byte address 0x4 - core index']
  #allocation1 [shape = 'u32[144,128]{1,0:T(1,128)}', space=vmem, size = 0x12000, scoped, tag = 'internal scratch']
  %s0 = inlined_call_operand.hbm [shape: f32[2,4,16,16], index: 0, kind: input, shape index: {}]
  %s1 = inlined_call_operand.hbm [shape: f32[2,1,8,128], index: 1, kind: output, shape index: {}]
  %s2 = sld [smem:[#allocation0]]
  $region41: #{tpu_custom_call.1} parent=0
    _
  %s4 = ssub.s32 1, %s2
  %s5 = scalar_select 0, %s4, %s2
  $region1: #{tpu_custom_call.1} parent=0
    #allocation2 [shape = 'u8[65536]{0}', space=vmem, size = 0x10000, scoped, tag = 'input window, operand 0']
    #allocation3 [shape = 's32[2]{0}', space=sflag, size = 0x8, scoped, tag = 'scoped memory for tpu_custom_call.1']
    #allocation4 [shape = 's32[2]{0}', space=sflag, size = 0x8, scoped, tag = 'scoped memory for tpu_custom_call.1']
    #allocation5 [shape = 'u8[8192]{0}', space=vmem, size = 0x2000, scoped, tag = 'output window, operand 0']
    %6 = vsyncpa [#allocation3], 0
    %s7 = scalar_lea.sflag [#allocation3], 1
    %8 = vsyncpa %s7, 0
    %9 = vsyncpa [#allocation4], 0
    %s10 = scalar_lea.sflag [#allocation4], 1
    %11 = vsyncpa %s10, 0
    loop: start=0, step=1, limit=4
    $region2: #{tpu_custom_call.1} parent=1 // loop_pre_header
      _
    $region3: #{tpu_custom_call.1} parent=1 // loop_header
      %s13 = sphi 0, %s17
      %p14 = scmp.ge.s32.totalorder %s13, 4
      %s20 = sphi 0, %s32
      %s21 = sphi 0, %s28
      %s22 = sphi 0, %s20
      %s23 = sphi 0, %s21
      %s24 = sphi 0, %s22
      %s25 = sphi 0, %s23
      %s37 = sphi 0, %s39
      %s40 = sphi 0, %s37
      %s41 = sphi 0, %s40
      %s57 = sphi 0, %s41
      %s65 = sphi 0, %s67
      %s68 = sphi 0, %s65
      %s69 = sphi 0, %s68
      %s85 = sphi 0, %s69
    $region4: #{tpu_custom_call.1} parent=1 // loop_header_branch
      %16 = sbr.rel (%p14) target = $region8
    $region5: #{tpu_custom_call.1} parent=1 // loop_body
      %s18 = ssub.s32 %s13, 1
      %s19 = ssub.s32 %s13, 2
      %s26 = sadd.s32 1, %s21
      %p27 = scmp.ge.s32.totalorder %s26, 1
      %s28 = scalar_select %p27, 0, %s26
      %s29 = sadd.s32 1, %s20
      %s30 = scalar_select %p27, %s29, %s20
      %p31 = scmp.ge.s32.totalorder %s30, 2
      %s32 = scalar_select %p31, 0, %s30
      %s33 = ssub.s32 %s20, %s32
      %s34 = ssub.s32 %s21, %s28
      %s35 = sor.u32 %s33, %s34
      %p36 = scmp.eq.s32.totalorder %s35, 0
      %s38 = sadd.s32 %s37, 1
      %s39 = scalar_select %p36, %s37, %s38
      %p42 = pneg %p36
      %p43 = scmp.eq.s32.totalorder %s13, 1
      %p44 = por %p42, %p43
      %p45 = scmp.ne.s32.totalorder %s37, %s40
      %p46 = scmp.eq.s32.totalorder %s13, 0
      %p47 = por %p45, %p46
      %p48 = scmp.ne.s32.totalorder %s37, %s40
      %p49 = scmp.eq.s32.totalorder %s18, 1
      %p50 = por %p48, %p49
      %p51 = scmp.ne.s32.totalorder %s40, %s41
      %p52 = scmp.eq.s32.totalorder %s18, 0
      %p53 = por %p51, %p52
      %p54 = scmp.ne.s32.totalorder %s40, %s41
      %p55 = scmp.eq.s32.totalorder %s19, 1
      %p56 = por %p54, %p55
      %p58 = scmp.ne.s32.totalorder %s41, %s57
      %p59 = scmp.eq.s32.totalorder %s19, 0
      %p60 = por %p58, %p59
      %s61 = ssub.s32 %s20, %s32
      %s62 = ssub.s32 %s21, %s28
      %s63 = sor.u32 %s61, %s62
      %p64 = scmp.eq.s32.totalorder %s63, 0
      %s66 = sadd.s32 %s65, 1
      %s67 = scalar_select %p64, %s65, %s66
      %p70 = pneg %p64
      %p71 = scmp.eq.s32.totalorder %s13, 1
      %p72 = por %p70, %p71
      %p73 = scmp.ne.s32.totalorder %s65, %s68
      %p74 = scmp.eq.s32.totalorder %s13, 0
      %p75 = por %p73, %p74
      %p76 = scmp.ne.s32.totalorder %s65, %s68
      %p77 = scmp.eq.s32.totalorder %s18, 1
      %p78 = por %p76, %p77
      %p79 = scmp.ne.s32.totalorder %s68, %s69
      %p80 = scmp.eq.s32.totalorder %s18, 0
      %p81 = por %p79, %p80
      %p82 = scmp.ne.s32.totalorder %s68, %s69
      %p83 = scmp.eq.s32.totalorder %s19, 1
      %p84 = por %p82, %p83
      %p86 = scmp.ne.s32.totalorder %s69, %s85
      %p87 = scmp.eq.s32.totalorder %s19, 0
      %p88 = por %p86, %p87
      %p89 = scmp.le.s32.totalorder 1, %s13
      %p90 = scmp.lt.s32.totalorder %s13, 3
      %p91 = pnand %p89, %p90
      %p92 = pneg %p91
      // Predicated region
      $region9: #{tpu_custom_call.1} parent=5 // pred_check
        _
      $region10: #{tpu_custom_call.1} parent=5 // pred_check_branch
        %94 = sbr.rel (%p91) target = $region12
      $region11: #{tpu_custom_call.1} parent=5 // pred_region
        %s95 = ssub.s32 %s13, 1
      $region12: #{tpu_custom_call.1} parent=5 // pred_fallthru
        _
      %p96 = scmp.lt.s32.totalorder %s13, 2
      // Predicated region
      $region13: #{tpu_custom_call.1} parent=5 // pred_check
        %p97 = pneg %p96
      $region14: #{tpu_custom_call.1} parent=5 // pred_check_branch
        %99 = sbr.rel (%p97) target = $region16
      $region15: #{tpu_custom_call.1} parent=5 // pred_region
        // Predicated region
        $region17: #{tpu_custom_call.1} parent=15 // pred_check
          %p100 = pneg %p47
        $region18: #{tpu_custom_call.1} parent=15 // pred_check_branch
          %102 = sbr.rel (%p100) target = $region20
        $region19: #{tpu_custom_call.1} parent=15 // pred_region
          %s103 = sand.u32 %s37, 1
          %s104 = scalar_lea.sflag [#allocation3], %s103
          %s105 = sand.u32 %s37, 1
          %s106 = smul.addr %s105, 64
          %s107 = scalar_lea.vmem [#allocation2], %s106
          %s108 = smul.u32 2, %s21
          %s110 = ssub.s32 1024, 1024
          %111 = vsyncadd %s104, %s110
          %s112 = smul.addr %s20, 8
          %s113 = sadd.s32 %s108, %s112
          %s114 = smul.addr %s113, 128
          %s115 = scalar_lea.hbm %s0, %s114
          %s116 = sshll.u32 %s107, 4
          %s117 = int_to_ptr.vmem [resolvable:$true] %s116
          %122 = dma.hbm_to_vmem [thread:$0]  %s115, 1024, %s117, %s104, 128, 128, 8
        $region20: #{tpu_custom_call.1} parent=15 // pred_fallthru
          _
      $region16: #{tpu_custom_call.1} parent=5 // pred_fallthru
        _
      %p123 = scmp.le.s32.totalorder 1, %s13
      %p124 = scmp.lt.s32.totalorder %s13, 3
      %p125 = pnand %p123, %p124
      %p126 = pneg %p125
      // Predicated region
      $region21: #{tpu_custom_call.1} parent=5 // pred_check
        _
      $region22: #{tpu_custom_call.1} parent=5 // pred_check_branch
        %128 = sbr.rel (%p125) target = $region24
      $region23: #{tpu_custom_call.1} parent=5 // pred_region
        %s129 = ssub.s32 %s13, 1
        %s130 = sand.u32 %s40, 1
        %s131 = scalar_lea.sflag [#allocation3], %s130
        %s132 = sand.u32 %s40, 1
        %s133 = smul.addr %s132, 64
        %s134 = scalar_lea.vmem [#allocation2], %s133
        // Predicated region
        $region25: #{tpu_custom_call.1} parent=23 // pred_check
          %p135 = pneg %p53
        $region26: #{tpu_custom_call.1} parent=23 // pred_check_branch
          %137 = sbr.rel (%p135) target = $region28
        $region27: #{tpu_custom_call.1} parent=23 // pred_region
          %138 = dma.done %s131, 1024
        $region28: #{tpu_custom_call.1} parent=23 // pred_fallthru
          _
        %s139 = sand.u32 %s40, 1
        %s140 = scalar_lea.sflag [#allocation3], %s139
        %s141 = sand.u32 %s40, 1
        %s142 = smul.addr %s141, 64
        %s143 = scalar_lea.vmem [#allocation2], %s142
        %p144 = pneg %p53
        %p145 = pneg %p50
        %p146 = pneg %p81
        %p147 = pneg %p78
        %s148 = sand.u32 %s68, 1
        %s149 = scalar_lea.sflag [#allocation4], %s148
        %s150 = sand.u32 %s68, 1
        %s151 = smul.addr %s150, 8
        %s152 = scalar_lea.vmem [#allocation5], %s151
        %s153 = smul.u32 2, %s23
        %v154 = vld [vmem:[%s134] sm:$0xff]
        %v155 = vld [vmem:[%s134 + $0x8] sm:$0xff]
        %v156 = vld [vmem:[%s134 + $0x10] sm:$0xff]
        %v157 = vld [vmem:[%s134 + $0x18] sm:$0xff]
        %v158 = vld [vmem:[%s134 + $0x20] sm:$0xff]
        %v159 = vld [vmem:[%s134 + $0x28] sm:$0xff]
        %v160 = vld [vmem:[%s134 + $0x30] sm:$0xff]
        %v161 = vld [vmem:[%s134 + $0x38] sm:$0xff]
        %170 = vrot.lane.b32.xlu0 %v154, 1
        %v171 = vpop.permute.xlu0 %170
        %172 = vrot.lane.b32.xlu0 %v155, 1
        %v173 = vpop.permute.xlu0 %172
        %174 = vrot.lane.b32.xlu0 %v156, 1
        %v175 = vpop.permute.xlu0 %174
        %176 = vrot.lane.b32.xlu0 %v157, 1
        %v177 = vpop.permute.xlu0 %176
        %178 = vrot.lane.b32.xlu0 %v158, 1
        %v179 = vpop.permute.xlu0 %178
        %180 = vrot.lane.b32.xlu0 %v159, 1
        %v181 = vpop.permute.xlu0 %180
        %182 = vrot.lane.b32.xlu0 %v160, 1
        %v183 = vpop.permute.xlu0 %182
        %184 = vrot.lane.b32.xlu0 %v161, 1
        %v185 = vpop.permute.xlu0 %184
        %v194 = vsub.f32 %v154, %v171
        %v195 = vsub.f32 %v155, %v173
        %v196 = vsub.f32 %v156, %v175
        %v197 = vsub.f32 %v157, %v177
        %v198 = vsub.f32 %v158, %v179
        %v199 = vsub.f32 %v159, %v181
        %v200 = vsub.f32 %v160, %v183
        %v201 = vsub.f32 %v161, %v185
        %210 = vrot.lane.b32.xlu0 %v194, 1
        %v211 = vpop.permute.xlu0 %210
        %212 = vrot.lane.b32.xlu0 %v195, 1
        %v213 = vpop.permute.xlu0 %212
        %214 = vrot.lane.b32.xlu0 %v196, 1
        %v215 = vpop.permute.xlu0 %214
        %216 = vrot.lane.b32.xlu0 %v197, 1
        %v217 = vpop.permute.xlu0 %216
        %218 = vrot.lane.b32.xlu0 %v198, 1
        %v219 = vpop.permute.xlu0 %218
        %220 = vrot.lane.b32.xlu0 %v199, 1
        %v221 = vpop.permute.xlu0 %220
        %222 = vrot.lane.b32.xlu0 %v200, 1
        %v223 = vpop.permute.xlu0 %222
        %224 = vrot.lane.b32.xlu0 %v201, 1
        %v225 = vpop.permute.xlu0 %224
        %v234 = vsub.f32 %v194, %v211
        %v235 = vsub.f32 %v195, %v213
        %v236 = vsub.f32 %v196, %v215
        %v237 = vsub.f32 %v197, %v217
        %v238 = vsub.f32 %v198, %v219
        %v239 = vsub.f32 %v199, %v221
        %v240 = vsub.f32 %v200, %v223
        %v241 = vsub.f32 %v201, %v225
        %v242 = vmul.f32 %v234, %v234
        %v243 = vmul.f32 %v235, %v235
        %v244 = vmul.f32 %v236, %v236
        %v245 = vmul.f32 %v237, %v237
        %v246 = vmul.f32 %v238, %v238
        %v247 = vmul.f32 %v239, %v239
        %v248 = vmul.f32 %v240, %v240
        %v249 = vmul.f32 %v241, %v241
        %258 = vrot.lane.b32.xlu0 %v242, 126
        %v259 = vpop.permute.xlu0 %258
        %260 = vrot.lane.b32.xlu0 %v243, 126
        %v261 = vpop.permute.xlu0 %260
        %262 = vrot.lane.b32.xlu0 %v244, 126
        %v263 = vpop.permute.xlu0 %262
        %264 = vrot.lane.b32.xlu0 %v245, 126
        %v265 = vpop.permute.xlu0 %264
        %266 = vrot.lane.b32.xlu0 %v246, 126
        %v267 = vpop.permute.xlu0 %266
        %268 = vrot.lane.b32.xlu0 %v247, 126
        %v269 = vpop.permute.xlu0 %268
        %270 = vrot.lane.b32.xlu0 %v248, 126
        %v271 = vpop.permute.xlu0 %270
        %272 = vrot.lane.b32.xlu0 %v249, 126
        %v273 = vpop.permute.xlu0 %272
        %vm282 = vcmask 113664
        %v283 = vsel %vm282, %v259, 0.0
        %v284 = vsel %vm282, %v261, 0.0
        %v285 = vadd.f32 %v283, %v284
        %v286 = vsel %vm282, %v263, 0.0
        %v287 = vadd.f32 %v285, %v286
        %v288 = vsel %vm282, %v265, 0.0
        %v289 = vadd.f32 %v287, %v288
        %v290 = vsel %vm282, %v267, 0.0
        %v291 = vadd.f32 %v289, %v290
        %v292 = vsel %vm282, %v269, 0.0
        %v293 = vadd.f32 %v291, %v292
        %v294 = vsel %vm282, %v271, 0.0
        %v295 = vadd.f32 %v293, %v294
        %v296 = vsel %vm282, %v273, 0.0
        %v297 = vadd.f32 %v295, %v296
        %298 = vadd.xlane.f32.xlu0 %v297
        %v299 = vpop.xlane.xlu0 %298
        %v300 = vrot.slane %v299, 4
        %v301 = vadd.f32 %v299, %v300
        %v302 = vrot.slane %v301, 2
        %v303 = vadd.f32 %v301, %v302
        %v304 = vrot.slane %v303, 1
        %v305 = vadd.f32 %v303, %v304
        %s306 = vtos %v305
        %vm307 = vcmask 1040384
        %v308 = vrot.slane %v154, 7
        %v309 = vrot.slane %v155, 7
        %v310 = vsel %vm307, %v308, %v309
        %v311 = vrot.slane %v156, 7
        %v312 = vrot.slane %v157, 7
        %v313 = vsel %vm307, %v311, %v312
        %v314 = vrot.slane %v158, 7
        %v315 = vrot.slane %v159, 7
        %v316 = vsel %vm307, %v314, %v315
        %v317 = vrot.slane %v160, 7
        %v318 = vrot.slane %v161, 7
        %v319 = vsel %vm307, %v317, %v318
        %v328 = vsub.f32 %v154, %v308
        %v329 = vsub.f32 %v155, %v310
        %v330 = vsub.f32 %v156, %v311
        %v331 = vsub.f32 %v157, %v313
        %v332 = vsub.f32 %v158, %v314
        %v333 = vsub.f32 %v159, %v316
        %v334 = vsub.f32 %v160, %v317
        %v335 = vsub.f32 %v161, %v319
        %344 = vrot.lane.b32.xlu0 %v328, 1
        %v345 = vpop.permute.xlu0 %344
        %346 = vrot.lane.b32.xlu0 %v329, 1
        %v347 = vpop.permute.xlu0 %346
        %348 = vrot.lane.b32.xlu0 %v330, 1
        %v349 = vpop.permute.xlu0 %348
        %350 = vrot.lane.b32.xlu0 %v331, 1
        %v351 = vpop.permute.xlu0 %350
        %352 = vrot.lane.b32.xlu0 %v332, 1
        %v353 = vpop.permute.xlu0 %352
        %354 = vrot.lane.b32.xlu0 %v333, 1
        %v355 = vpop.permute.xlu0 %354
        %356 = vrot.lane.b32.xlu0 %v334, 1
        %v357 = vpop.permute.xlu0 %356
        %358 = vrot.lane.b32.xlu0 %v335, 1
        %v359 = vpop.permute.xlu0 %358
        %v368 = vsub.f32 %v328, %v345
        %v369 = vsub.f32 %v329, %v347
        %v370 = vsub.f32 %v330, %v349
        %v371 = vsub.f32 %v331, %v351
        %v372 = vsub.f32 %v332, %v353
        %v373 = vsub.f32 %v333, %v355
        %v374 = vsub.f32 %v334, %v357
        %v375 = vsub.f32 %v335, %v359
        %v376 = vmul.f32 %v368, %v368
        %v377 = vmul.f32 %v369, %v369
        %v378 = vmul.f32 %v370, %v370
        %v379 = vmul.f32 %v371, %v371
        %v380 = vmul.f32 %v372, %v372
        %v381 = vmul.f32 %v373, %v373
        %v382 = vmul.f32 %v374, %v374
        %v383 = vmul.f32 %v375, %v375
        %vm392 = vcmask 1046528
        %v393 = vrot.slane %v376, 1
        %v394 = vrot.slane %v377, 1
        %v395 = vsel %vm392, %v393, %v394
        %v396 = vrot.slane %v378, 1
        %v397 = vrot.slane %v379, 1
        %v398 = vsel %vm392, %v396, %v397
        %v399 = vrot.slane %v380, 1
        %v400 = vrot.slane %v381, 1
        %v401 = vsel %vm392, %v399, %v400
        %v402 = vrot.slane %v382, 1
        %v403 = vrot.slane %v383, 1
        %v404 = vsel %vm392, %v402, %v403
        %405 = vrot.lane.b32.xlu0 %v395, 127
        %v406 = vpop.permute.xlu0 %405
        %407 = vrot.lane.b32.xlu0 %v394, 127
        %v408 = vpop.permute.xlu0 %407
        %409 = vrot.lane.b32.xlu0 %v398, 127
        %v410 = vpop.permute.xlu0 %409
        %411 = vrot.lane.b32.xlu0 %v397, 127
        %v412 = vpop.permute.xlu0 %411
        %413 = vrot.lane.b32.xlu0 %v401, 127
        %v414 = vpop.permute.xlu0 %413
        %415 = vrot.lane.b32.xlu0 %v400, 127
        %v416 = vpop.permute.xlu0 %415
        %417 = vrot.lane.b32.xlu0 %v404, 127
        %v418 = vpop.permute.xlu0 %417
        %419 = vrot.lane.b32.xlu0 %v403, 127
        %v420 = vpop.permute.xlu0 %419
        %vm429 = vcmask 121856
        %v430 = vsel %vm429, %v406, 0.0
        %vm431 = vcmask 120832
        %v432 = vsel %vm431, %v408, 0.0
        %v433 = vadd.f32 %v430, %v432
        %v434 = vsel %vm429, %v410, 0.0
        %v435 = vadd.f32 %v433, %v434
        %v436 = vsel %vm431, %v412, 0.0
        %v437 = vadd.f32 %v435, %v436
        %v438 = vsel %vm429, %v414, 0.0
        %v439 = vadd.f32 %v437, %v438
        %v440 = vsel %vm431, %v416, 0.0
        %v441 = vadd.f32 %v439, %v440
        %v442 = vsel %vm429, %v418, 0.0
        %v443 = vadd.f32 %v441, %v442
        %v444 = vsel %vm431, %v420, 0.0
        %v445 = vadd.f32 %v443, %v444
        %446 = vadd.xlane.f32.xlu0 %v445
        %v447 = vpop.xlane.xlu0 %446
        %v448 = vrot.slane %v447, 4
        %v449 = vadd.f32 %v447, %v448
        %v450 = vrot.slane %v449, 2
        %v451 = vadd.f32 %v449, %v450
        %v452 = vrot.slane %v451, 1
        %v453 = vadd.f32 %v451, %v452
        %s454 = vtos %v453
        %v455 = vrot.slane %v328, 7
        %v456 = vrot.slane %v329, 7
        %v457 = vsel %vm307, %v455, %v456
        %v458 = vrot.slane %v330, 7
        %v459 = vrot.slane %v331, 7
        %v460 = vsel %vm307, %v458, %v459
        %v461 = vrot.slane %v332, 7
        %v462 = vrot.slane %v333, 7
        %v463 = vsel %vm307, %v461, %v462
        %v464 = vrot.slane %v334, 7
        %v465 = vrot.slane %v335, 7
        %v466 = vsel %vm307, %v464, %v465
        %v475 = vsub.f32 %v328, %v455
        %v476 = vsub.f32 %v329, %v457
        %v477 = vsub.f32 %v330, %v458
        %v478 = vsub.f32 %v331, %v460
        %v479 = vsub.f32 %v332, %v461
        %v480 = vsub.f32 %v333, %v463
        %v481 = vsub.f32 %v334, %v464
        %v482 = vsub.f32 %v335, %v466
        %v483 = vmul.f32 %v475, %v475
        %v484 = vmul.f32 %v476, %v476
        %v485 = vmul.f32 %v477, %v477
        %v486 = vmul.f32 %v478, %v478
        %v487 = vmul.f32 %v479, %v479
        %v488 = vmul.f32 %v480, %v480
        %v489 = vmul.f32 %v481, %v481
        %v490 = vmul.f32 %v482, %v482
        %vm499 = vcmask 1045504
        %v500 = vrot.slane %v483, 2
        %v501 = vrot.slane %v484, 2
        %v502 = vsel %vm499, %v500, %v501
        %v503 = vrot.slane %v485, 2
        %v504 = vrot.slane %v486, 2
        %v505 = vsel %vm499, %v503, %v504
        %v506 = vrot.slane %v487, 2
        %v507 = vrot.slane %v488, 2
        %v508 = vsel %vm499, %v506, %v507
        %v509 = vrot.slane %v489, 2
        %v510 = vrot.slane %v490, 2
        %v511 = vsel %vm499, %v509, %v510
        %vm520 = vcmask 130048
        %v521 = vsel %vm520, %v502, 0.0
        %vm522 = vcmask 128000
        %v523 = vsel %vm522, %v501, 0.0
        %v524 = vadd.f32 %v521, %v523
        %v525 = vsel %vm520, %v505, 0.0
        %v526 = vadd.f32 %v524, %v525
        %v527 = vsel %vm522, %v504, 0.0
        %v528 = vadd.f32 %v526, %v527
        %v529 = vsel %vm520, %v508, 0.0
        %v530 = vadd.f32 %v528, %v529
        %v531 = vsel %vm522, %v507, 0.0
        %v532 = vadd.f32 %v530, %v531
        %v533 = vsel %vm520, %v511, 0.0
        %v534 = vadd.f32 %v532, %v533
        %v535 = vsel %vm522, %v510, 0.0
        %v536 = vadd.f32 %v534, %v535
        %537 = vadd.xlane.f32.xlu0 %v536
        %v538 = vpop.xlane.xlu0 %537
        %v539 = vrot.slane %v538, 4
        %v540 = vadd.f32 %v538, %v539
        %v541 = vrot.slane %v540, 2
        %v542 = vadd.f32 %v540, %v541
        %v543 = vrot.slane %v542, 1
        %v544 = vadd.f32 %v542, %v543
        %s545 = vtos %v544
        %v546 = vlaneseq
        %v547 = vand.u32 %v546, 127
        %vm548 = vcmp.eq.s32.totalorder %v547, 0
        %v549 = vstv %s545
        %v550 = vsel %vm548, %v549, 0.0
        %vm551 = vcmp.eq.s32.totalorder %v547, 1
        %v552 = vstv %s306
        %v553 = vsel %vm551, %v552, %v550
        %vm554 = vcmp.eq.s32.totalorder %v547, 2
        %v555 = vstv %s454
        %v556 = vsel %vm554, %v555, %v553
        %557 = vst [vmem:[%s152] sm:$0xff] %v556
        %s558 = sand.u32 %s68, 1
        %s559 = scalar_lea.sflag [#allocation4], %s558
        %s560 = sand.u32 %s68, 1
        %s561 = smul.addr %s560, 8
        %s562 = scalar_lea.vmem [#allocation5], %s561
        // Predicated region
        $region29: #{tpu_custom_call.1} parent=23 // pred_check
          %p563 = pneg %p78
        $region30: #{tpu_custom_call.1} parent=23 // pred_check_branch
          %565 = sbr.rel (%p563) target = $region32
        $region31: #{tpu_custom_call.1} parent=23 // pred_region
          %s567 = ssub.s32 128, 128
          %568 = vsyncadd %s559, %s567
          %s569 = sadd.s32 %s23, %s22
          %s570 = smul.addr %s569, 128
          %s571 = scalar_lea.hbm %s1, %s570
          %s573 = sshll.u32 %s562, 4
          %s574 = int_to_ptr.vmem [resolvable:$true] %s573
          %576 = dma.vmem_to_hbm [thread:$0]  %s574, 128, %s571, %s559
        $region32: #{tpu_custom_call.1} parent=23 // pred_fallthru
          _
      $region24: #{tpu_custom_call.1} parent=5 // pred_fallthru
        _
      %p577 = scmp.le.s32.totalorder 2, %s13
      // Predicated region
      $region33: #{tpu_custom_call.1} parent=5 // pred_check
        %p578 = pneg %p577
      $region34: #{tpu_custom_call.1} parent=5 // pred_check_branch
        %580 = sbr.rel (%p578) target = $region36
      $region35: #{tpu_custom_call.1} parent=5 // pred_region
        %s581 = ssub.s32 %s13, 2
        // Predicated region
        $region37: #{tpu_custom_call.1} parent=35 // pred_check
          %p582 = pneg %p84
        $region38: #{tpu_custom_call.1} parent=35 // pred_check_branch
          %584 = sbr.rel (%p582) target = $region40
        $region39: #{tpu_custom_call.1} parent=35 // pred_region
          %s585 = sand.u32 %s69, 1
          %s586 = scalar_lea.sflag [#allocation4], %s585
          %s587 = sand.u32 %s69, 1
          %s588 = smul.addr %s587, 8
          %s589 = scalar_lea.vmem [#allocation5], %s588
          %590 = dma.done %s586, 128
        $region40: #{tpu_custom_call.1} parent=35 // pred_fallthru
          _
      $region36: #{tpu_custom_call.1} parent=5 // pred_fallthru
        _
    $region6: #{tpu_custom_call.1} parent=1 // loop_footer
      %s17 = sadd.s32 1, %s13
    $region7: #{tpu_custom_call.1} parent=1 // loop_footer_branch
      %12 = sbr.rel target = $region3
    $region8: #{tpu_custom_call.1} parent=1 // loop_exit
      _
    %591 = vsyncpa [#allocation3], 1
    %s592 = scalar_lea.sflag [#allocation3], 1
    %593 = vsyncpa %s592, 1
    %594 = vsyncpa [#allocation4], 1
    %s595 = scalar_lea.sflag [#allocation4], 1
    %596 = vsyncpa %s595, 1

</llo_original>
